<compile_context>
chip_gen: v7x
topology: tpu7x:2x2x1
jax: 0.10.0
libtpu: 0.0.40
codegen_flags: <defaults>
</compile_context>

<pallas_src>
import functools

import jax
import jax.numpy as jnp
from jax.experimental import pallas as pl
from jax.experimental.pallas import tpu as pltpu


def _lane_roll_left(v, k):
    """output[:, j] = v[:, (j + k) % lanes]; static lane slicing + concat."""
    if k == 0:
        return v
    return jnp.concatenate([v[:, k:], v[:, :k]], axis=1)


# ----------------------------------------------------------------------------
# Fused kernel: one grid step == one res_projection layer.
# Activation layout: (T, C*B*N), column index = c*(B*N) + b*N + n.
# ----------------------------------------------------------------------------
def _res_proj_kernel(x_ref,
                     wmu_ref, bmu_ref, wmg_ref, bmg_ref,
                     wgu_ref, bgu_ref, wgg_ref, bgg_ref,
                     wadj_ref,
                     o_ref, *, heads, channels, lane_slab):
    layer = pl.program_id(0)
    t_out = o_ref.shape[0]                               # T (seq_out == seq_in)

    # Load the input once; afterwards the activation lives in o_ref (resident
    # in VMEM across the layer grid because its block index never changes).
    @pl.when(layer == 0)
    def _():
        o_ref[...] = x_ref[...]

    x0 = o_ref[...]                                      # (T, M) f32
    x0b = x0.astype(jnp.bfloat16)

    # ---- gated_mlp (time projection); dropout == identity in eval ----
    v = jnp.tanh(
        jnp.dot(wmu_ref[...], x0b, preferred_element_type=jnp.float32)
        + bmu_ref[...])
    g = jax.nn.sigmoid(
        jnp.dot(wmg_ref[...], x0b, preferred_element_type=jnp.float32)
        + bmg_ref[...])
    x1 = x0 + g * (v - x0)
    x1b = x1.astype(jnp.bfloat16)

    # ---- gated_gcn ----
    # All-head time projection of update_proj in ONE MXU matmul:
    #   p[h*T + t', (i, b, n)] = sum_s Wu[t', h*T+s] * x1[b, i, n, s]
    p = jnp.dot(wgu_ref[...], x1b, preferred_element_type=jnp.float32)   # (H*T, M)
    wadj = wadj_ref[...]                                                 # (H*C, M) f32

    # Channel mix without the Kronecker expansion: for relative channel shift
    # d, rotating p left by d*lane_slab lanes aligns source channel (c+d)%C
    # under output channel c; the precomputed lane multiplier carries
    # adj[h, c, (c+d)%C].
    u = None
    for d in range(channels):
        pr = _lane_roll_left(p, d * lane_slab)
        for h in range(heads):
            w_hd = wadj[h * channels + d:h * channels + d + 1, :]        # (1, M)
            term = w_hd * pr[h * t_out:(h + 1) * t_out, :]
            u = term if u is None else u + term
    u = jnp.tanh(u + bgu_ref[...])                       # tanh(update); dropout = id

    gate = jax.nn.sigmoid(
        jnp.dot(wgg_ref[...], x1b, preferred_element_type=jnp.float32)
        + bgg_ref[...])
    x2 = x1 + gate * (u - x1)

    # ---- residual + tanh ----
    o_ref[...] = x0 + jnp.tanh(x2)


# ----------------------------------------------------------------------------
# Wrapper: parameter-only glue + one pallas_call for the whole stack of layers
# ----------------------------------------------------------------------------
def res_projection_forward(x, params):
    B, C, N, T = x.shape
    L = len(params)
    H = params[0]["nodes1"].shape[0]
    BN = B * N
    M = C * BN                      # lane width of the working activation (128 here)

    # -------- parameter-only glue (runs once, outside the kernel) --------
    nodes1 = jnp.stack([p["nodes1"] for p in params])            # (L, H, C, hid)
    nodes2 = jnp.stack([p["nodes2"] for p in params])
    adj = jnp.einsum("lhcd,lhkd->lhck", nodes1, nodes2)
    adj = adj + (-1e9) * jnp.eye(C, dtype=jnp.float32)
    adj = jax.nn.softmax(adj, axis=-1)                           # (L, H, C, C)

    # Lane-broadcast adjacency multipliers for the roll-based channel mix:
    #   wadj[l, h*C + d, c*BN + bn] = adj[l, h, c, (c + d) % C]
    c_idx = jnp.arange(C)
    gathered = jnp.stack(
        [adj[:, :, c_idx, (c_idx + d) % C] for d in range(C)], axis=2)   # (L,H,d,c)
    wadj = jnp.broadcast_to(gathered[..., None], (L, H, C, C, BN))
    wadj = wadj.reshape(L, H * C, M).astype(jnp.float32)

    # Per-layer weights stacked on a leading L axis; MXU operands in bf16.
    wmu = jnp.stack([p["wmu"] for p in params]).astype(jnp.bfloat16)     # (L,T,T)
    wmg = jnp.stack([p["wmg"] for p in params]).astype(jnp.bfloat16)
    wgg = jnp.stack([p["wgg"] for p in params]).astype(jnp.bfloat16)
    # update_proj (T, H*T) -> per-head stacked (H*T_out, T_in), head-major rows
    wgu = jnp.stack(
        [p["wgu"].reshape(T, H, T).transpose(1, 0, 2).reshape(H * T, T)
         for p in params]).astype(jnp.bfloat16)                          # (L,H*T,T)
    bmu = jnp.stack([p["bmu"] for p in params])[:, :, None]              # (L,T,1) f32
    bmg = jnp.stack([p["bmg"] for p in params])[:, :, None]
    bgu = jnp.stack([p["bgu"] for p in params])[:, :, None]
    bgg = jnp.stack([p["bgg"] for p in params])[:, :, None]

    # Lane-dense, time-major activation slab: X[t, c*B*N + b*N + n]
    x_t = jnp.transpose(x, (3, 1, 0, 2)).reshape(T, M)

    def per_layer(*shape):
        return pl.BlockSpec((None,) + shape, lambda l: (l,) + (0,) * len(shape))

    y_t = pl.pallas_call(
        functools.partial(_res_proj_kernel, heads=H, channels=C, lane_slab=BN),
        out_shape=jax.ShapeDtypeStruct((T, M), jnp.float32),
        grid=(L,),
        in_specs=[
            pl.BlockSpec((T, M), lambda l: (0, 0)),   # x (fetched once; constant index)
            per_layer(T, T), per_layer(T, 1),         # gated_mlp.update      W, b
            per_layer(T, T), per_layer(T, 1),         # gated_mlp.gate        W, b
            per_layer(H * T, T), per_layer(T, 1),     # gated_gcn.update_proj W, b
            per_layer(T, T), per_layer(T, 1),         # gated_gcn.gate_proj   W, b
            per_layer(H * C, M),                      # adjacency lane multipliers
        ],
        out_specs=pl.BlockSpec((T, M), lambda l: (0, 0)),   # resident activation
        compiler_params=pltpu.CompilerParams(
            dimension_semantics=("arbitrary",)),      # layers are sequential
    )(x_t, wmu, bmu, wmg, bmg, wgu, bgu, wgg, bgg, wadj)

    # Back to the module's (B, C, N, T) layout.
    return jnp.transpose(y_t.reshape(T, C, B, N), (2, 1, 3, 0))


# ----------------------------------------------------------------------------
# Parameters (deterministic synthetic init; shapes match the nn.Module)
# ----------------------------------------------------------------------------
def init_params(key, seq, channels, heads, hid_dim, layers):
    def linear(k, out_f, in_f):
        kw, kb = jax.random.split(k)
        bound = 1.0 / jnp.sqrt(jnp.float32(in_f))
        w = jax.random.uniform(kw, (out_f, in_f), jnp.float32, -bound, bound)
        b = jax.random.uniform(kb, (out_f,), jnp.float32, -bound, bound)
        return w, b

    params = []
    for layer in range(layers):
        ks = jax.random.split(jax.random.fold_in(key, layer), 6)
        wmu, bmu = linear(ks[0], seq, seq)                 # gated_mlp.update
        wmg, bmg = linear(ks[1], seq, seq)                 # gated_mlp.gate
        nodes1 = jax.random.normal(ks[2], (heads, channels, hid_dim), jnp.float32)
        nodes2 = jax.random.normal(ks[3], (heads, channels, hid_dim), jnp.float32)
        wgu, bgu = linear(ks[4], seq, heads * seq)         # gated_gcn.update_proj
        wgg, bgg = linear(ks[5], seq, seq)                 # gated_gcn.gate_proj
        params.append(dict(wmu=wmu, bmu=bmu, wmg=wmg, bmg=bmg,
                           nodes1=nodes1, nodes2=nodes2,
                           wgu=wgu, bgu=bgu, wgg=wgg, bgg=bgg))
    return params


# ----------------------------------------------------------------------------
# Pure-JAX reference (direct transcription of the PyTorch forward, eval mode)
# ----------------------------------------------------------------------------
def reference_forward(x, params):
    B, C, N, T = x.shape
    for p in params:
        H = p["nodes1"].shape[0]
        res = x
        # gated_mlp
        v = jnp.tanh(jnp.einsum("bcnt,ot->bcno", x, p["wmu"]) + p["bmu"])
        g = jax.nn.sigmoid(jnp.einsum("bcnt,ot->bcno", x, p["wmg"]) + p["bmg"])
        x = g * v + (1.0 - g) * x
        # gated_gcn
        adj = jnp.matmul(p["nodes1"], jnp.swapaxes(p["nodes2"], 1, 2))
        adj = adj + (-1e9) * jnp.eye(C, dtype=jnp.float32)[None]
        adj = jax.nn.softmax(adj, axis=-1)
        gg = jnp.einsum("hoi,bins->bhons", adj, x)
        gg = jnp.transpose(gg, (0, 2, 3, 1, 4)).reshape(B, C, N, H * T)
        gg = jnp.tanh(jnp.einsum("bcnk,ok->bcno", gg, p["wgu"]) + p["bgu"])
        gate = jax.nn.sigmoid(jnp.einsum("bcnt,ot->bcno", x, p["wgg"]) + p["bgg"])
        x = gate * gg + (1.0 - gate) * x
        x = res + jnp.tanh(x)
    return x


if __name__ == "__main__":
    B, C, N, T = 2, 4, 16, 8          # batch, channels, nodes, seq (seq_in == seq_out)
    HEADS, HID_DIM, LAYERS = 3, 10, 4

    key = jax.random.PRNGKey(0)
    kx, kp = jax.random.split(key)
    x = jax.random.normal(kx, (B, C, N, T), jnp.float32)
    params = init_params(kp, T, C, HEADS, HID_DIM, LAYERS)

    y = jax.block_until_ready(jax.jit(res_projection_forward)(x, params))
    y_ref = jax.block_until_ready(reference_forward(x, params))

    assert y.shape == (B, C, N, T)
    # Tolerance accounts for bf16 MXU operands (f32 accumulation) across 4
    # residual layers; structural errors would show up as O(0.1..1) mismatches.
    err = float(jnp.max(jnp.abs(y - y_ref)))
    assert jnp.allclose(y, y_ref, atol=5e-2, rtol=5e-2), (
        "mismatch vs reference: max abs diff = %e" % err)

    print("KERNEL_OK")
</pallas_src>

<mosaic_0001>
module attributes {stable_mosaic.version = 11 : i64} {
  func.func @_res_proj_kernel(%arg0: i32, %arg1: memref<8x128xf32, #tpu.memory_space<vmem>>, %arg2: memref<1x8x8xbf16, #tpu.memory_space<vmem>>, %arg3: memref<1x8x1xf32, #tpu.memory_space<vmem>>, %arg4: memref<1x8x8xbf16, #tpu.memory_space<vmem>>, %arg5: memref<1x8x1xf32, #tpu.memory_space<vmem>>, %arg6: memref<1x24x8xbf16, #tpu.memory_space<vmem>>, %arg7: memref<1x8x1xf32, #tpu.memory_space<vmem>>, %arg8: memref<1x8x8xbf16, #tpu.memory_space<vmem>>, %arg9: memref<1x8x1xf32, #tpu.memory_space<vmem>>, %arg10: memref<1x12x128xf32, #tpu.memory_space<vmem>>, %arg11: memref<8x128xf32, #tpu.memory_space<vmem>>) attributes {dimension_semantics = [#tpu.dimension_semantics<arbitrary>], iteration_bounds = array<i64: 4>, scalar_prefetch = 0 : i64, scratch_operands = 0 : i64, tpu.core_type = #tpu.core_type<tc>, window_params = [{pipeline_mode = #tpu.pipeline_mode<synchronous>, transform_indices = @transform_0, window_bounds = array<i64: 8, 128>}, {transform_indices = @transform_1, window_bounds = array<i64: 1, 8, 8>}, {transform_indices = @transform_2, window_bounds = array<i64: 1, 8, 1>}, {transform_indices = @transform_3, window_bounds = array<i64: 1, 8, 8>}, {transform_indices = @transform_4, window_bounds = array<i64: 1, 8, 1>}, {transform_indices = @transform_5, window_bounds = array<i64: 1, 24, 8>}, {transform_indices = @transform_6, window_bounds = array<i64: 1, 8, 1>}, {transform_indices = @transform_7, window_bounds = array<i64: 1, 8, 8>}, {transform_indices = @transform_8, window_bounds = array<i64: 1, 8, 1>}, {transform_indices = @transform_9, window_bounds = array<i64: 1, 12, 128>}, {pipeline_mode = #tpu.pipeline_mode<synchronous>, transform_indices = @transform_10, window_bounds = array<i64: 8, 128>}]} {
    %c0_i32 = arith.constant 0 : i32
    %0 = arith.cmpi eq, %arg0, %c0_i32 : i32
    %1 = arith.extui %0 : i1 to i32
    %c0_i32_0 = arith.constant 0 : i32
    %2 = arith.cmpi ne, %1, %c0_i32_0 : i32
    scf.if %2 {
      %c0_36 = arith.constant 0 : index
      %c0_37 = arith.constant 0 : index
      %125 = vector.load %arg1[%c0_36, %c0_37] : memref<8x128xf32, #tpu.memory_space<vmem>>, vector<8x128xf32>
      %c0_38 = arith.constant 0 : index
      %c0_39 = arith.constant 0 : index
      %126 = vector.load %arg11[%c0_38, %c0_39] : memref<8x128xf32, #tpu.memory_space<vmem>>, vector<8x128xf32>
      tpu.vector_store %arg11[%c0_38, %c0_39], %125 {strides = array<i32>} : memref<8x128xf32, #tpu.memory_space<vmem>>, vector<8x128xf32>,
    } else {
    }
    %c0 = arith.constant 0 : index
    %c0_1 = arith.constant 0 : index
    %3 = vector.load %arg11[%c0, %c0_1] : memref<8x128xf32, #tpu.memory_space<vmem>>, vector<8x128xf32>
    %4 = arith.truncf %3 : vector<8x128xf32> to vector<8x128xbf16>
    %c0_2 = arith.constant 0 : index
    %c0_3 = arith.constant 0 : index
    %c0_4 = arith.constant 0 : index
    %5 = vector.load %arg2[%c0_2, %c0_3, %c0_4] : memref<1x8x8xbf16, #tpu.memory_space<vmem>>, vector<1x8x8xbf16>
    %6 = vector.shape_cast %5 : vector<1x8x8xbf16> to vector<8x8xbf16>
    %cst = arith.constant dense<0.000000e+00> : vector<8x128xf32>
    %7 = tpu.matmul %6, %4, %cst {dimension_numbers = #tpu.dot_dimension_numbers<[1], [0], [0], [1], [0, 0, 1, 1], [], []>} : vector<8x8xbf16>, vector<8x128xbf16>, vector<8x128xf32> -> vector<8x128xf32>
    %c0_5 = arith.constant 0 : index
    %c0_6 = arith.constant 0 : index
    %c0_7 = arith.constant 0 : index
    %8 = vector.load %arg3[%c0_5, %c0_6, %c0_7] : memref<1x8x1xf32, #tpu.memory_space<vmem>>, vector<1x8x1xf32>
    %9 = vector.shape_cast %8 : vector<1x8x1xf32> to vector<8x1xf32>
    %10 = vector.broadcast %9 : vector<8x1xf32> to vector<8x128xf32>
    %11 = arith.addf %7, %10 : vector<8x128xf32>
    %12 = math.tanh %11 : vector<8x128xf32>
    %c0_8 = arith.constant 0 : index
    %c0_9 = arith.constant 0 : index
    %c0_10 = arith.constant 0 : index
    %13 = vector.load %arg4[%c0_8, %c0_9, %c0_10] : memref<1x8x8xbf16, #tpu.memory_space<vmem>>, vector<1x8x8xbf16>
    %14 = vector.shape_cast %13 : vector<1x8x8xbf16> to vector<8x8xbf16>
    %cst_11 = arith.constant dense<0.000000e+00> : vector<8x128xf32>
    %15 = tpu.matmul %14, %4, %cst_11 {dimension_numbers = #tpu.dot_dimension_numbers<[1], [0], [0], [1], [0, 0, 1, 1], [], []>} : vector<8x8xbf16>, vector<8x128xbf16>, vector<8x128xf32> -> vector<8x128xf32>
    %c0_12 = arith.constant 0 : index
    %c0_13 = arith.constant 0 : index
    %c0_14 = arith.constant 0 : index
    %16 = vector.load %arg5[%c0_12, %c0_13, %c0_14] : memref<1x8x1xf32, #tpu.memory_space<vmem>>, vector<1x8x1xf32>
    %17 = vector.shape_cast %16 : vector<1x8x1xf32> to vector<8x1xf32>
    %18 = vector.broadcast %17 : vector<8x1xf32> to vector<8x128xf32>
    %19 = arith.addf %15, %18 : vector<8x128xf32>
    %20 = arith.negf %19 : vector<8x128xf32>
    %21 = math.exp %20 : vector<8x128xf32>
    %cst_15 = arith.constant 1.000000e+00 : f32
    %22 = vector.broadcast %cst_15 : f32 to vector<8x128xf32>
    %23 = arith.addf %22, %21 : vector<8x128xf32>
    %24 = arith.divf %22, %23 : vector<8x128xf32>
    %25 = arith.subf %12, %3 : vector<8x128xf32>
    %26 = arith.mulf %24, %25 : vector<8x128xf32>
    %27 = arith.addf %3, %26 : vector<8x128xf32>
    %28 = arith.truncf %27 : vector<8x128xf32> to vector<8x128xbf16>
    %c0_16 = arith.constant 0 : index
    %c0_17 = arith.constant 0 : index
    %c0_18 = arith.constant 0 : index
    %29 = vector.load %arg6[%c0_16, %c0_17, %c0_18] : memref<1x24x8xbf16, #tpu.memory_space<vmem>>, vector<1x24x8xbf16>
    %30 = vector.shape_cast %29 : vector<1x24x8xbf16> to vector<24x8xbf16>
    %cst_19 = arith.constant dense<0.000000e+00> : vector<24x128xf32>
    %31 = tpu.matmul %30, %28, %cst_19 {dimension_numbers = #tpu.dot_dimension_numbers<[1], [0], [0], [1], [0, 0, 1, 1], [], []>} : vector<24x8xbf16>, vector<8x128xbf16>, vector<24x128xf32> -> vector<24x128xf32>
    %c0_20 = arith.constant 0 : index
    %c0_21 = arith.constant 0 : index
    %c0_22 = arith.constant 0 : index
    %32 = vector.load %arg10[%c0_20, %c0_21, %c0_22] : memref<1x12x128xf32, #tpu.memory_space<vmem>>, vector<1x12x128xf32>
    %33 = vector.shape_cast %32 : vector<1x12x128xf32> to vector<12x128xf32>
    %34 = vector.extract_strided_slice %33 {offsets = [0, 0], sizes = [1, 128], strides = [1, 1]} : vector<12x128xf32> to vector<1x128xf32>
    %35 = vector.extract_strided_slice %31 {offsets = [0, 0], sizes = [8, 128], strides = [1, 1]} : vector<24x128xf32> to vector<8x128xf32>
    %36 = vector.broadcast %34 : vector<1x128xf32> to vector<8x128xf32>
    %37 = arith.mulf %36, %35 : vector<8x128xf32>
    %38 = vector.extract_strided_slice %33 {offsets = [4, 0], sizes = [1, 128], strides = [1, 1]} : vector<12x128xf32> to vector<1x128xf32>
    %39 = vector.extract_strided_slice %31 {offsets = [8, 0], sizes = [8, 128], strides = [1, 1]} : vector<24x128xf32> to vector<8x128xf32>
    %40 = vector.broadcast %38 : vector<1x128xf32> to vector<8x128xf32>
    %41 = arith.mulf %40, %39 : vector<8x128xf32>
    %42 = arith.addf %37, %41 : vector<8x128xf32>
    %43 = vector.extract_strided_slice %33 {offsets = [8, 0], sizes = [1, 128], strides = [1, 1]} : vector<12x128xf32> to vector<1x128xf32>
    %44 = vector.extract_strided_slice %31 {offsets = [16, 0], sizes = [8, 128], strides = [1, 1]} : vector<24x128xf32> to vector<8x128xf32>
    %45 = vector.broadcast %43 : vector<1x128xf32> to vector<8x128xf32>
    %46 = arith.mulf %45, %44 : vector<8x128xf32>
    %47 = arith.addf %42, %46 : vector<8x128xf32>
    %48 = vector.extract_strided_slice %31 {offsets = [0, 32], sizes = [24, 96], strides = [1, 1]} : vector<24x128xf32> to vector<24x96xf32>
    %49 = vector.extract_strided_slice %31 {offsets = [0, 0], sizes = [24, 32], strides = [1, 1]} : vector<24x128xf32> to vector<24x32xf32>
    %50 = tpu.concatenate %48, %49 in 1 : vector<24x96xf32>, vector<24x32xf32> -> vector<24x128xf32>
    %51 = vector.extract_strided_slice %33 {offsets = [1, 0], sizes = [1, 128], strides = [1, 1]} : vector<12x128xf32> to vector<1x128xf32>
    %52 = vector.extract_strided_slice %50 {offsets = [0, 0], sizes = [8, 128], strides = [1, 1]} : vector<24x128xf32> to vector<8x128xf32>
    %53 = vector.broadcast %51 : vector<1x128xf32> to vector<8x128xf32>
    %54 = arith.mulf %53, %52 : vector<8x128xf32>
    %55 = arith.addf %47, %54 : vector<8x128xf32>
    %56 = vector.extract_strided_slice %33 {offsets = [5, 0], sizes = [1, 128], strides = [1, 1]} : vector<12x128xf32> to vector<1x128xf32>
    %57 = vector.extract_strided_slice %50 {offsets = [8, 0], sizes = [8, 128], strides = [1, 1]} : vector<24x128xf32> to vector<8x128xf32>
    %58 = vector.broadcast %56 : vector<1x128xf32> to vector<8x128xf32>
    %59 = arith.mulf %58, %57 : vector<8x128xf32>
    %60 = arith.addf %55, %59 : vector<8x128xf32>
    %61 = vector.extract_strided_slice %33 {offsets = [9, 0], sizes = [1, 128], strides = [1, 1]} : vector<12x128xf32> to vector<1x128xf32>
    %62 = vector.extract_strided_slice %50 {offsets = [16, 0], sizes = [8, 128], strides = [1, 1]} : vector<24x128xf32> to vector<8x128xf32>
    %63 = vector.broadcast %61 : vector<1x128xf32> to vector<8x128xf32>
    %64 = arith.mulf %63, %62 : vector<8x128xf32>
    %65 = arith.addf %60, %64 : vector<8x128xf32>
    %66 = vector.extract_strided_slice %31 {offsets = [0, 64], sizes = [24, 64], strides = [1, 1]} : vector<24x128xf32> to vector<24x64xf32>
    %67 = vector.extract_strided_slice %31 {offsets = [0, 0], sizes = [24, 64], strides = [1, 1]} : vector<24x128xf32> to vector<24x64xf32>
    %68 = tpu.concatenate %66, %67 in 1 : vector<24x64xf32>, vector<24x64xf32> -> vector<24x128xf32>
    %69 = vector.extract_strided_slice %33 {offsets = [2, 0], sizes = [1, 128], strides = [1, 1]} : vector<12x128xf32> to vector<1x128xf32>
    %70 = vector.extract_strided_slice %68 {offsets = [0, 0], sizes = [8, 128], strides = [1, 1]} : vector<24x128xf32> to vector<8x128xf32>
    %71 = vector.broadcast %69 : vector<1x128xf32> to vector<8x128xf32>
    %72 = arith.mulf %71, %70 : vector<8x128xf32>
    %73 = arith.addf %65, %72 : vector<8x128xf32>
    %74 = vector.extract_strided_slice %33 {offsets = [6, 0], sizes = [1, 128], strides = [1, 1]} : vector<12x128xf32> to vector<1x128xf32>
    %75 = vector.extract_strided_slice %68 {offsets = [8, 0], sizes = [8, 128], strides = [1, 1]} : vector<24x128xf32> to vector<8x128xf32>
    %76 = vector.broadcast %74 : vector<1x128xf32> to vector<8x128xf32>
    %77 = arith.mulf %76, %75 : vector<8x128xf32>
    %78 = arith.addf %73, %77 : vector<8x128xf32>
    %79 = vector.extract_strided_slice %33 {offsets = [10, 0], sizes = [1, 128], strides = [1, 1]} : vector<12x128xf32> to vector<1x128xf32>
    %80 = vector.extract_strided_slice %68 {offsets = [16, 0], sizes = [8, 128], strides = [1, 1]} : vector<24x128xf32> to vector<8x128xf32>
    %81 = vector.broadcast %79 : vector<1x128xf32> to vector<8x128xf32>
    %82 = arith.mulf %81, %80 : vector<8x128xf32>
    %83 = arith.addf %78, %82 : vector<8x128xf32>
    %84 = vector.extract_strided_slice %31 {offsets = [0, 96], sizes = [24, 32], strides = [1, 1]} : vector<24x128xf32> to vector<24x32xf32>
    %85 = vector.extract_strided_slice %31 {offsets = [0, 0], sizes = [24, 96], strides = [1, 1]} : vector<24x128xf32> to vector<24x96xf32>
    %86 = tpu.concatenate %84, %85 in 1 : vector<24x32xf32>, vector<24x96xf32> -> vector<24x128xf32>
    %87 = vector.extract_strided_slice %33 {offsets = [3, 0], sizes = [1, 128], strides = [1, 1]} : vector<12x128xf32> to vector<1x128xf32>
    %88 = vector.extract_strided_slice %86 {offsets = [0, 0], sizes = [8, 128], strides = [1, 1]} : vector<24x128xf32> to vector<8x128xf32>
    %89 = vector.broadcast %87 : vector<1x128xf32> to vector<8x128xf32>
    %90 = arith.mulf %89, %88 : vector<8x128xf32>
    %91 = arith.addf %83, %90 : vector<8x128xf32>
    %92 = vector.extract_strided_slice %33 {offsets = [7, 0], sizes = [1, 128], strides = [1, 1]} : vector<12x128xf32> to vector<1x128xf32>
    %93 = vector.extract_strided_slice %86 {offsets = [8, 0], sizes = [8, 128], strides = [1, 1]} : vector<24x128xf32> to vector<8x128xf32>
    %94 = vector.broadcast %92 : vector<1x128xf32> to vector<8x128xf32>
    %95 = arith.mulf %94, %93 : vector<8x128xf32>
    %96 = arith.addf %91, %95 : vector<8x128xf32>
    %97 = vector.extract_strided_slice %33 {offsets = [11, 0], sizes = [1, 128], strides = [1, 1]} : vector<12x128xf32> to vector<1x128xf32>
    %98 = vector.extract_strided_slice %86 {offsets = [16, 0], sizes = [8, 128], strides = [1, 1]} : vector<24x128xf32> to vector<8x128xf32>
    %99 = vector.broadcast %97 : vector<1x128xf32> to vector<8x128xf32>
    %100 = arith.mulf %99, %98 : vector<8x128xf32>
    %101 = arith.addf %96, %100 : vector<8x128xf32>
    %c0_23 = arith.constant 0 : index
    %c0_24 = arith.constant 0 : index
    %c0_25 = arith.constant 0 : index
    %102 = vector.load %arg7[%c0_23, %c0_24, %c0_25] : memref<1x8x1xf32, #tpu.memory_space<vmem>>, vector<1x8x1xf32>
    %103 = vector.shape_cast %102 : vector<1x8x1xf32> to vector<8x1xf32>
    %104 = vector.broadcast %103 : vector<8x1xf32> to vector<8x128xf32>
    %105 = arith.addf %101, %104 : vector<8x128xf32>
    %106 = math.tanh %105 : vector<8x128xf32>
    %c0_26 = arith.constant 0 : index
    %c0_27 = arith.constant 0 : index
    %c0_28 = arith.constant 0 : index
    %107 = vector.load %arg8[%c0_26, %c0_27, %c0_28] : memref<1x8x8xbf16, #tpu.memory_space<vmem>>, vector<1x8x8xbf16>
    %108 = vector.shape_cast %107 : vector<1x8x8xbf16> to vector<8x8xbf16>
    %cst_29 = arith.constant dense<0.000000e+00> : vector<8x128xf32>
    %109 = tpu.matmul %108, %28, %cst_29 {dimension_numbers = #tpu.dot_dimension_numbers<[1], [0], [0], [1], [0, 0, 1, 1], [], []>} : vector<8x8xbf16>, vector<8x128xbf16>, vector<8x128xf32> -> vector<8x128xf32>
    %c0_30 = arith.constant 0 : index
    %c0_31 = arith.constant 0 : index
    %c0_32 = arith.constant 0 : index
    %110 = vector.load %arg9[%c0_30, %c0_31, %c0_32] : memref<1x8x1xf32, #tpu.memory_space<vmem>>, vector<1x8x1xf32>
    %111 = vector.shape_cast %110 : vector<1x8x1xf32> to vector<8x1xf32>
    %112 = vector.broadcast %111 : vector<8x1xf32> to vector<8x128xf32>
    %113 = arith.addf %109, %112 : vector<8x128xf32>
    %114 = arith.negf %113 : vector<8x128xf32>
    %115 = math.exp %114 : vector<8x128xf32>
    %cst_33 = arith.constant 1.000000e+00 : f32
    %116 = vector.broadcast %cst_33 : f32 to vector<8x128xf32>
    %117 = arith.addf %116, %115 : vector<8x128xf32>
    %118 = arith.divf %116, %117 : vector<8x128xf32>
    %119 = arith.subf %106, %27 : vector<8x128xf32>
    %120 = arith.mulf %118, %119 : vector<8x128xf32>
    %121 = arith.addf %27, %120 : vector<8x128xf32>
    %122 = math.tanh %121 : vector<8x128xf32>
    %123 = arith.addf %3, %122 : vector<8x128xf32>
    %c0_34 = arith.constant 0 : index
    %c0_35 = arith.constant 0 : index
    %124 = vector.load %arg11[%c0_34, %c0_35] : memref<8x128xf32, #tpu.memory_space<vmem>>, vector<8x128xf32>
    tpu.vector_store %arg11[%c0_34, %c0_35], %123 {strides = array<i32>} : memref<8x128xf32, #tpu.memory_space<vmem>>, vector<8x128xf32>,
    return
  }
  func.func @transform_0(%arg0: i32) -> (i32, i32) {
    %c0_i32 = arith.constant 0 : i32
    %c0_i32_0 = arith.constant 0 : i32
    %c0_i32_1 = arith.constant 0 : i32
    return %c0_i32, %c0_i32_0 : i32, i32
  }
  func.func @transform_1(%arg0: i32) -> (i32, i32, i32) {
    %c0_i32 = arith.constant 0 : i32
    %c0_i32_0 = arith.constant 0 : i32
    %c0_i32_1 = arith.constant 0 : i32
    return %arg0, %c0_i32, %c0_i32_0 : i32, i32, i32
  }
  func.func @transform_2(%arg0: i32) -> (i32, i32, i32) {
    %c0_i32 = arith.constant 0 : i32
    %c0_i32_0 = arith.constant 0 : i32
    %c0_i32_1 = arith.constant 0 : i32
    return %arg0, %c0_i32, %c0_i32_0 : i32, i32, i32
  }
  func.func @transform_3(%arg0: i32) -> (i32, i32, i32) {
    %c0_i32 = arith.constant 0 : i32
    %c0_i32_0 = arith.constant 0 : i32
    %c0_i32_1 = arith.constant 0 : i32
    return %arg0, %c0_i32, %c0_i32_0 : i32, i32, i32
  }
  func.func @transform_4(%arg0: i32) -> (i32, i32, i32) {
    %c0_i32 = arith.constant 0 : i32
    %c0_i32_0 = arith.constant 0 : i32
    %c0_i32_1 = arith.constant 0 : i32
    return %arg0, %c0_i32, %c0_i32_0 : i32, i32, i32
  }
  func.func @transform_5(%arg0: i32) -> (i32, i32, i32) {
    %c0_i32 = arith.constant 0 : i32
    %c0_i32_0 = arith.constant 0 : i32
    %c0_i32_1 = arith.constant 0 : i32
    return %arg0, %c0_i32, %c0_i32_0 : i32, i32, i32
  }
  func.func @transform_6(%arg0: i32) -> (i32, i32, i32) {
    %c0_i32 = arith.constant 0 : i32
    %c0_i32_0 = arith.constant 0 : i32
    %c0_i32_1 = arith.constant 0 : i32
    return %arg0, %c0_i32, %c0_i32_0 : i32, i32, i32
  }
  func.func @transform_7(%arg0: i32) -> (i32, i32, i32) {
    %c0_i32 = arith.constant 0 : i32
    %c0_i32_0 = arith.constant 0 : i32
    %c0_i32_1 = arith.constant 0 : i32
    return %arg0, %c0_i32, %c0_i32_0 : i32, i32, i32
  }
  func.func @transform_8(%arg0: i32) -> (i32, i32, i32) {
    %c0_i32 = arith.constant 0 : i32
    %c0_i32_0 = arith.constant 0 : i32
    %c0_i32_1 = arith.constant 0 : i32
    return %arg0, %c0_i32, %c0_i32_0 : i32, i32, i32
  }
  func.func @transform_9(%arg0: i32) -> (i32, i32, i32) {
    %c0_i32 = arith.constant 0 : i32
    %c0_i32_0 = arith.constant 0 : i32
    %c0_i32_1 = arith.constant 0 : i32
    return %arg0, %c0_i32, %c0_i32_0 : i32, i32, i32
  }
  func.func @transform_10(%arg0: i32) -> (i32, i32) {
    %c0_i32 = arith.constant 0 : i32
    %c0_i32_0 = arith.constant 0 : i32
    %c0_i32_1 = arith.constant 0 : i32
    return %c0_i32, %c0_i32_0 : i32, i32
  }
}

</mosaic_0001>

<llo_original>
// kernel: res_projection_forward.1
$region0: #{res_projection_forward.1}
  #allocation0 [shape = 'u32[]', space=smem, size = 0x4, offset = 0x4, fixed_abs, tag = 'smem constant byte address 0x4 - core index']
  #allocation1 [shape = 'u32[144,128]{1,0:T(1,128)}', space=vmem, size = 0x12000, scoped, tag = 'internal scratch']
  %s0 = inlined_call_operand.vmem [shape: f32[8,128], index: 0, kind: input, shape index: {}]
  %s1 = inlined_call_operand.vmem [shape: bf16[4,8,8], index: 1, kind: input, shape index: {}]
  %s2 = inlined_call_operand.vmem [shape: f32[4,8,1], index: 2, kind: input, shape index: {}]
  %s3 = inlined_call_operand.vmem [shape: bf16[4,8,8], index: 3, kind: input, shape index: {}]
  %s4 = inlined_call_operand.vmem [shape: f32[4,8,1], index: 4, kind: input, shape index: {}]
  %s5 = inlined_call_operand.vmem [shape: bf16[4,24,8], index: 5, kind: input, shape index: {}]
  %s6 = inlined_call_operand.vmem [shape: f32[4,8,1], index: 6, kind: input, shape index: {}]
  %s7 = inlined_call_operand.vmem [shape: bf16[4,8,8], index: 7, kind: input, shape index: {}]
  %s8 = inlined_call_operand.vmem [shape: f32[4,8,1], index: 8, kind: input, shape index: {}]
  %s9 = inlined_call_operand.vmem [shape: f32[4,12,128], index: 9, kind: input, shape index: {}]
  %s10 = inlined_call_operand.vmem [shape: f32[8,128], index: 10, kind: output, shape index: {}]
  %s11 = sld [smem:[#allocation0]]
  $region77: #{res_projection_forward.1} parent=0
    _
  %s13 = ssub.s32 1, %s11
  %s14 = scalar_select 0, %s13, %s11
  loop: start=0, step=1, limit=6
  $region2: #{res_projection_forward.1} parent=0 // loop_pre_header
    _
  $region3: #{res_projection_forward.1} parent=0 // loop_header
    %s16 = sphi 0, %s20
    %p17 = scmp.ge.s32.totalorder %s16, 6
    %s24 = sphi 0, %s24
    %s26 = sphi 0, %s24
    %s27 = sphi 0, %s26
    %s41 = sphi 0, %s27
    %s47 = sphi 0, %s49
    %s50 = sphi 0, %s47
    %s51 = sphi 0, %s50
    %s67 = sphi 0, %s51
    %s73 = sphi 0, %s75
    %s76 = sphi 0, %s73
    %s77 = sphi 0, %s76
    %s93 = sphi 0, %s77
    %s99 = sphi 0, %s101
    %s102 = sphi 0, %s99
    %s103 = sphi 0, %s102
    %s119 = sphi 0, %s103
    %s125 = sphi 0, %s127
    %s128 = sphi 0, %s125
    %s129 = sphi 0, %s128
    %s145 = sphi 0, %s129
    %s151 = sphi 0, %s153
    %s154 = sphi 0, %s151
    %s155 = sphi 0, %s154
    %s171 = sphi 0, %s155
    %s177 = sphi 0, %s179
    %s180 = sphi 0, %s177
    %s181 = sphi 0, %s180
    %s197 = sphi 0, %s181
    %s203 = sphi 0, %s205
    %s206 = sphi 0, %s203
    %s207 = sphi 0, %s206
    %s223 = sphi 0, %s207
    %s229 = sphi 0, %s231
    %s232 = sphi 0, %s229
    %s233 = sphi 0, %s232
    %s249 = sphi 0, %s233
    %s255 = sphi 0, %s257
    %s258 = sphi 0, %s255
    %s259 = sphi 0, %s258
    %s275 = sphi 0, %s259
    %s279 = sphi 0, %s279
    %s281 = sphi 0, %s279
    %s282 = sphi 0, %s281
    %s296 = sphi 0, %s282
  $region4: #{res_projection_forward.1} parent=0 // loop_header_branch
    %19 = sbr.rel (%p17) target = $region8
  $region5: #{res_projection_forward.1} parent=0 // loop_body
    %s21 = ssub.s32 %s16, 1
    %s22 = ssub.s32 %s16, 2
    %s23 = sadd.s32 %s16, 1
    %s25 = sadd.s32 %s24, 1
    %p28 = scmp.eq.s32.totalorder %s16, 3
    %p29 = scmp.ne.s32.totalorder %s24, %s26
    %p30 = scmp.eq.s32.totalorder %s16, 0
    %p31 = por %p29, %p30
    %p32 = scmp.ne.s32.totalorder %s24, %s26
    %p33 = scmp.eq.s32.totalorder %s21, 3
    %p34 = por %p32, %p33
    %p35 = scmp.ne.s32.totalorder %s26, %s27
    %p36 = scmp.eq.s32.totalorder %s21, 0
    %p37 = por %p35, %p36
    %p38 = scmp.ne.s32.totalorder %s26, %s27
    %p39 = scmp.eq.s32.totalorder %s22, 3
    %p40 = por %p38, %p39
    %p42 = scmp.ne.s32.totalorder %s27, %s41
    %p43 = scmp.eq.s32.totalorder %s22, 0
    %p44 = por %p42, %p43
    %s45 = ssub.s32 %s16, %s23
    %p46 = scmp.eq.s32.totalorder %s45, 0
    %s48 = sadd.s32 %s47, 1
    %s49 = scalar_select %p46, %s47, %s48
    %p52 = pneg %p46
    %p53 = scmp.eq.s32.totalorder %s16, 3
    %p54 = por %p52, %p53
    %p55 = scmp.ne.s32.totalorder %s47, %s50
    %p56 = scmp.eq.s32.totalorder %s16, 0
    %p57 = por %p55, %p56
    %p58 = scmp.ne.s32.totalorder %s47, %s50
    %p59 = scmp.eq.s32.totalorder %s21, 3
    %p60 = por %p58, %p59
    %p61 = scmp.ne.s32.totalorder %s50, %s51
    %p62 = scmp.eq.s32.totalorder %s21, 0
    %p63 = por %p61, %p62
    %p64 = scmp.ne.s32.totalorder %s50, %s51
    %p65 = scmp.eq.s32.totalorder %s22, 3
    %p66 = por %p64, %p65
    %p68 = scmp.ne.s32.totalorder %s51, %s67
    %p69 = scmp.eq.s32.totalorder %s22, 0
    %p70 = por %p68, %p69
    %s71 = ssub.s32 %s16, %s23
    %p72 = scmp.eq.s32.totalorder %s71, 0
    %s74 = sadd.s32 %s73, 1
    %s75 = scalar_select %p72, %s73, %s74
    %p78 = pneg %p72
    %p79 = scmp.eq.s32.totalorder %s16, 3
    %p80 = por %p78, %p79
    %p81 = scmp.ne.s32.totalorder %s73, %s76
    %p82 = scmp.eq.s32.totalorder %s16, 0
    %p83 = por %p81, %p82
    %p84 = scmp.ne.s32.totalorder %s73, %s76
    %p85 = scmp.eq.s32.totalorder %s21, 3
    %p86 = por %p84, %p85
    %p87 = scmp.ne.s32.totalorder %s76, %s77
    %p88 = scmp.eq.s32.totalorder %s21, 0
    %p89 = por %p87, %p88
    %p90 = scmp.ne.s32.totalorder %s76, %s77
    %p91 = scmp.eq.s32.totalorder %s22, 3
    %p92 = por %p90, %p91
    %p94 = scmp.ne.s32.totalorder %s77, %s93
    %p95 = scmp.eq.s32.totalorder %s22, 0
    %p96 = por %p94, %p95
    %s97 = ssub.s32 %s16, %s23
    %p98 = scmp.eq.s32.totalorder %s97, 0
    %s100 = sadd.s32 %s99, 1
    %s101 = scalar_select %p98, %s99, %s100
    %p104 = pneg %p98
    %p105 = scmp.eq.s32.totalorder %s16, 3
    %p106 = por %p104, %p105
    %p107 = scmp.ne.s32.totalorder %s99, %s102
    %p108 = scmp.eq.s32.totalorder %s16, 0
    %p109 = por %p107, %p108
    %p110 = scmp.ne.s32.totalorder %s99, %s102
    %p111 = scmp.eq.s32.totalorder %s21, 3
    %p112 = por %p110, %p111
    %p113 = scmp.ne.s32.totalorder %s102, %s103
    %p114 = scmp.eq.s32.totalorder %s21, 0
    %p115 = por %p113, %p114
    %p116 = scmp.ne.s32.totalorder %s102, %s103
    %p117 = scmp.eq.s32.totalorder %s22, 3
    %p118 = por %p116, %p117
    %p120 = scmp.ne.s32.totalorder %s103, %s119
    %p121 = scmp.eq.s32.totalorder %s22, 0
    %p122 = por %p120, %p121
    %s123 = ssub.s32 %s16, %s23
    %p124 = scmp.eq.s32.totalorder %s123, 0
    %s126 = sadd.s32 %s125, 1
    %s127 = scalar_select %p124, %s125, %s126
    %p130 = pneg %p124
    %p131 = scmp.eq.s32.totalorder %s16, 3
    %p132 = por %p130, %p131
    %p133 = scmp.ne.s32.totalorder %s125, %s128
    %p134 = scmp.eq.s32.totalorder %s16, 0
    %p135 = por %p133, %p134
    %p136 = scmp.ne.s32.totalorder %s125, %s128
    %p137 = scmp.eq.s32.totalorder %s21, 3
    %p138 = por %p136, %p137
    %p139 = scmp.ne.s32.totalorder %s128, %s129
    %p140 = scmp.eq.s32.totalorder %s21, 0
    %p141 = por %p139, %p140
    %p142 = scmp.ne.s32.totalorder %s128, %s129
    %p143 = scmp.eq.s32.totalorder %s22, 3
    %p144 = por %p142, %p143
    %p146 = scmp.ne.s32.totalorder %s129, %s145
    %p147 = scmp.eq.s32.totalorder %s22, 0
    %p148 = por %p146, %p147
    %s149 = ssub.s32 %s16, %s23
    %p150 = scmp.eq.s32.totalorder %s149, 0
    %s152 = sadd.s32 %s151, 1
    %s153 = scalar_select %p150, %s151, %s152
    %p156 = pneg %p150
    %p157 = scmp.eq.s32.totalorder %s16, 3
    %p158 = por %p156, %p157
    %p159 = scmp.ne.s32.totalorder %s151, %s154
    %p160 = scmp.eq.s32.totalorder %s16, 0
    %p161 = por %p159, %p160
    %p162 = scmp.ne.s32.totalorder %s151, %s154
    %p163 = scmp.eq.s32.totalorder %s21, 3
    %p164 = por %p162, %p163
    %p165 = scmp.ne.s32.totalorder %s154, %s155
    %p166 = scmp.eq.s32.totalorder %s21, 0
    %p167 = por %p165, %p166
    %p168 = scmp.ne.s32.totalorder %s154, %s155
    %p169 = scmp.eq.s32.totalorder %s22, 3
    %p170 = por %p168, %p169
    %p172 = scmp.ne.s32.totalorder %s155, %s171
    %p173 = scmp.eq.s32.totalorder %s22, 0
    %p174 = por %p172, %p173
    %s175 = ssub.s32 %s16, %s23
    %p176 = scmp.eq.s32.totalorder %s175, 0
    %s178 = sadd.s32 %s177, 1
    %s179 = scalar_select %p176, %s177, %s178
    %p182 = pneg %p176
    %p183 = scmp.eq.s32.totalorder %s16, 3
    %p184 = por %p182, %p183
    %p185 = scmp.ne.s32.totalorder %s177, %s180
    %p186 = scmp.eq.s32.totalorder %s16, 0
    %p187 = por %p185, %p186
    %p188 = scmp.ne.s32.totalorder %s177, %s180
    %p189 = scmp.eq.s32.totalorder %s21, 3
    %p190 = por %p188, %p189
    %p191 = scmp.ne.s32.totalorder %s180, %s181
    %p192 = scmp.eq.s32.totalorder %s21, 0
    %p193 = por %p191, %p192
    %p194 = scmp.ne.s32.totalorder %s180, %s181
    %p195 = scmp.eq.s32.totalorder %s22, 3
    %p196 = por %p194, %p195
    %p198 = scmp.ne.s32.totalorder %s181, %s197
    %p199 = scmp.eq.s32.totalorder %s22, 0
    %p200 = por %p198, %p199
    %s201 = ssub.s32 %s16, %s23
    %p202 = scmp.eq.s32.totalorder %s201, 0
    %s204 = sadd.s32 %s203, 1
    %s205 = scalar_select %p202, %s203, %s204
    %p208 = pneg %p202
    %p209 = scmp.eq.s32.totalorder %s16, 3
    %p210 = por %p208, %p209
    %p211 = scmp.ne.s32.totalorder %s203, %s206
    %p212 = scmp.eq.s32.totalorder %s16, 0
    %p213 = por %p211, %p212
    %p214 = scmp.ne.s32.totalorder %s203, %s206
    %p215 = scmp.eq.s32.totalorder %s21, 3
    %p216 = por %p214, %p215
    %p217 = scmp.ne.s32.totalorder %s206, %s207
    %p218 = scmp.eq.s32.totalorder %s21, 0
    %p219 = por %p217, %p218
    %p220 = scmp.ne.s32.totalorder %s206, %s207
    %p221 = scmp.eq.s32.totalorder %s22, 3
    %p222 = por %p220, %p221
    %p224 = scmp.ne.s32.totalorder %s207, %s223
    %p225 = scmp.eq.s32.totalorder %s22, 0
    %p226 = por %p224, %p225
    %s227 = ssub.s32 %s16, %s23
    %p228 = scmp.eq.s32.totalorder %s227, 0
    %s230 = sadd.s32 %s229, 1
    %s231 = scalar_select %p228, %s229, %s230
    %p234 = pneg %p228
    %p235 = scmp.eq.s32.totalorder %s16, 3
    %p236 = por %p234, %p235
    %p237 = scmp.ne.s32.totalorder %s229, %s232
    %p238 = scmp.eq.s32.totalorder %s16, 0
    %p239 = por %p237, %p238
    %p240 = scmp.ne.s32.totalorder %s229, %s232
    %p241 = scmp.eq.s32.totalorder %s21, 3
    %p242 = por %p240, %p241
    %p243 = scmp.ne.s32.totalorder %s232, %s233
    %p244 = scmp.eq.s32.totalorder %s21, 0
    %p245 = por %p243, %p244
    %p246 = scmp.ne.s32.totalorder %s232, %s233
    %p247 = scmp.eq.s32.totalorder %s22, 3
    %p248 = por %p246, %p247
    %p250 = scmp.ne.s32.totalorder %s233, %s249
    %p251 = scmp.eq.s32.totalorder %s22, 0
    %p252 = por %p250, %p251
    %s253 = ssub.s32 %s16, %s23
    %p254 = scmp.eq.s32.totalorder %s253, 0
    %s256 = sadd.s32 %s255, 1
    %s257 = scalar_select %p254, %s255, %s256
    %p260 = pneg %p254
    %p261 = scmp.eq.s32.totalorder %s16, 3
    %p262 = por %p260, %p261
    %p263 = scmp.ne.s32.totalorder %s255, %s258
    %p264 = scmp.eq.s32.totalorder %s16, 0
    %p265 = por %p263, %p264
    %p266 = scmp.ne.s32.totalorder %s255, %s258
    %p267 = scmp.eq.s32.totalorder %s21, 3
    %p268 = por %p266, %p267
    %p269 = scmp.ne.s32.totalorder %s258, %s259
    %p270 = scmp.eq.s32.totalorder %s21, 0
    %p271 = por %p269, %p270
    %p272 = scmp.ne.s32.totalorder %s258, %s259
    %p273 = scmp.eq.s32.totalorder %s22, 3
    %p274 = por %p272, %p273
    %p276 = scmp.ne.s32.totalorder %s259, %s275
    %p277 = scmp.eq.s32.totalorder %s22, 0
    %p278 = por %p276, %p277
    %s280 = sadd.s32 %s279, 1
    %p283 = scmp.eq.s32.totalorder %s16, 3
    %p284 = scmp.ne.s32.totalorder %s279, %s281
    %p285 = scmp.eq.s32.totalorder %s16, 0
    %p286 = por %p284, %p285
    %p287 = scmp.ne.s32.totalorder %s279, %s281
    %p288 = scmp.eq.s32.totalorder %s21, 3
    %p289 = por %p287, %p288
    %p290 = scmp.ne.s32.totalorder %s281, %s282
    %p291 = scmp.eq.s32.totalorder %s21, 0
    %p292 = por %p290, %p291
    %p293 = scmp.ne.s32.totalorder %s281, %s282
    %p294 = scmp.eq.s32.totalorder %s22, 3
    %p295 = por %p293, %p294
    %p297 = scmp.ne.s32.totalorder %s282, %s296
    %p298 = scmp.eq.s32.totalorder %s22, 0
    %p299 = por %p297, %p298
    %p300 = scmp.le.s32.totalorder 1, %s16
    %p301 = scmp.lt.s32.totalorder %s16, 5
    %p302 = pnand %p300, %p301
    %p303 = pneg %p302
    // Predicated region
    $region9: #{res_projection_forward.1} parent=5 // pred_check
      _
    $region10: #{res_projection_forward.1} parent=5 // pred_check_branch
      %305 = sbr.rel (%p302) target = $region12
    $region11: #{res_projection_forward.1} parent=5 // pred_region
      %s306 = ssub.s32 %s16, 1
      // Predicated region
      $region13: #{res_projection_forward.1} parent=11 // pred_check
        %p307 = pneg %p37
      $region14: #{res_projection_forward.1} parent=11 // pred_check_branch
        %309 = sbr.rel (%p307) target = $region16
      $region15: #{res_projection_forward.1} parent=11 // pred_region
        _
      $region16: #{res_projection_forward.1} parent=11 // pred_fallthru
        _
    $region12: #{res_projection_forward.1} parent=5 // pred_fallthru
      _
    %p310 = scmp.lt.s32.totalorder %s16, 4
    // Predicated region
    $region17: #{res_projection_forward.1} parent=5 // pred_check
      %p311 = pneg %p310
    $region18: #{res_projection_forward.1} parent=5 // pred_check_branch
      %313 = sbr.rel (%p311) target = $region20
    $region19: #{res_projection_forward.1} parent=5 // pred_region
      // Predicated region
      $region21: #{res_projection_forward.1} parent=19 // pred_check
        %p314 = pneg %p57
      $region22: #{res_projection_forward.1} parent=19 // pred_check_branch
        %316 = sbr.rel (%p314) target = $region24
      $region23: #{res_projection_forward.1} parent=19 // pred_region
        %p317 = scmp.lt.s32.totalorder %s16, 3
        %s318 = scalar_select %p317, %s16, 3
        %s319 = smul.addr %s318, 4
        %s320 = scalar_lea.vmem %s1, %s319
      $region24: #{res_projection_forward.1} parent=19 // pred_fallthru
        _
      // Predicated region
      $region25: #{res_projection_forward.1} parent=19 // pred_check
        %p321 = pneg %p83
      $region26: #{res_projection_forward.1} parent=19 // pred_check_branch
        %323 = sbr.rel (%p321) target = $region28
      $region27: #{res_projection_forward.1} parent=19 // pred_region
        %p324 = scmp.lt.s32.totalorder %s16, 3
        %s325 = scalar_select %p324, %s16, 3
        %s326 = smul.addr %s325, 8
        %s327 = scalar_lea.vmem %s2, %s326
      $region28: #{res_projection_forward.1} parent=19 // pred_fallthru
        _
      // Predicated region
      $region29: #{res_projection_forward.1} parent=19 // pred_check
        %p328 = pneg %p109
      $region30: #{res_projection_forward.1} parent=19 // pred_check_branch
        %330 = sbr.rel (%p328) target = $region32
      $region31: #{res_projection_forward.1} parent=19 // pred_region
        %p331 = scmp.lt.s32.totalorder %s16, 3
        %s332 = scalar_select %p331, %s16, 3
        %s333 = smul.addr %s332, 4
        %s334 = scalar_lea.vmem %s3, %s333
      $region32: #{res_projection_forward.1} parent=19 // pred_fallthru
        _
      // Predicated region
      $region33: #{res_projection_forward.1} parent=19 // pred_check
        %p335 = pneg %p135
      $region34: #{res_projection_forward.1} parent=19 // pred_check_branch
        %337 = sbr.rel (%p335) target = $region36
      $region35: #{res_projection_forward.1} parent=19 // pred_region
        %p338 = scmp.lt.s32.totalorder %s16, 3
        %s339 = scalar_select %p338, %s16, 3
        %s340 = smul.addr %s339, 8
        %s341 = scalar_lea.vmem %s4, %s340
      $region36: #{res_projection_forward.1} parent=19 // pred_fallthru
        _
      // Predicated region
      $region37: #{res_projection_forward.1} parent=19 // pred_check
        %p342 = pneg %p161
      $region38: #{res_projection_forward.1} parent=19 // pred_check_branch
        %344 = sbr.rel (%p342) target = $region40
      $region39: #{res_projection_forward.1} parent=19 // pred_region
        %p345 = scmp.lt.s32.totalorder %s16, 3
        %s346 = scalar_select %p345, %s16, 3
        %s347 = smul.addr %s346, 3
        %s348 = smul.addr %s347, 4
        %s349 = scalar_lea.vmem %s5, %s348
      $region40: #{res_projection_forward.1} parent=19 // pred_fallthru
        _
      // Predicated region
      $region41: #{res_projection_forward.1} parent=19 // pred_check
        %p350 = pneg %p187
      $region42: #{res_projection_forward.1} parent=19 // pred_check_branch
        %352 = sbr.rel (%p350) target = $region44
      $region43: #{res_projection_forward.1} parent=19 // pred_region
        %p353 = scmp.lt.s32.totalorder %s16, 3
        %s354 = scalar_select %p353, %s16, 3
        %s355 = smul.addr %s354, 8
        %s356 = scalar_lea.vmem %s6, %s355
      $region44: #{res_projection_forward.1} parent=19 // pred_fallthru
        _
      // Predicated region
      $region45: #{res_projection_forward.1} parent=19 // pred_check
        %p357 = pneg %p213
      $region46: #{res_projection_forward.1} parent=19 // pred_check_branch
        %359 = sbr.rel (%p357) target = $region48
      $region47: #{res_projection_forward.1} parent=19 // pred_region
        %p360 = scmp.lt.s32.totalorder %s16, 3
        %s361 = scalar_select %p360, %s16, 3
        %s362 = smul.addr %s361, 4
        %s363 = scalar_lea.vmem %s7, %s362
      $region48: #{res_projection_forward.1} parent=19 // pred_fallthru
        _
      // Predicated region
      $region49: #{res_projection_forward.1} parent=19 // pred_check
        %p364 = pneg %p239
      $region50: #{res_projection_forward.1} parent=19 // pred_check_branch
        %366 = sbr.rel (%p364) target = $region52
      $region51: #{res_projection_forward.1} parent=19 // pred_region
        %p367 = scmp.lt.s32.totalorder %s16, 3
        %s368 = scalar_select %p367, %s16, 3
        %s369 = smul.addr %s368, 8
        %s370 = scalar_lea.vmem %s8, %s369
      $region52: #{res_projection_forward.1} parent=19 // pred_fallthru
        _
      // Predicated region
      $region53: #{res_projection_forward.1} parent=19 // pred_check
        %p371 = pneg %p265
      $region54: #{res_projection_forward.1} parent=19 // pred_check_branch
        %373 = sbr.rel (%p371) target = $region56
      $region55: #{res_projection_forward.1} parent=19 // pred_region
        %p374 = scmp.lt.s32.totalorder %s16, 3
        %s375 = scalar_select %p374, %s16, 3
        %s376 = smul.addr %s375, 2
        %s377 = smul.addr %s376, 8
        %s378 = scalar_lea.vmem %s9, %s377
      $region56: #{res_projection_forward.1} parent=19 // pred_fallthru
        _
    $region20: #{res_projection_forward.1} parent=5 // pred_fallthru
      _
    %p379 = scmp.le.s32.totalorder 1, %s16
    %p380 = scmp.lt.s32.totalorder %s16, 5
    %p381 = pnand %p379, %p380
    %p382 = pneg %p381
    // Predicated region
    $region57: #{res_projection_forward.1} parent=5 // pred_check
      _
    $region58: #{res_projection_forward.1} parent=5 // pred_check_branch
      %384 = sbr.rel (%p381) target = $region60
    $region59: #{res_projection_forward.1} parent=5 // pred_region
      %s385 = ssub.s32 %s16, 1
      %p386 = pneg %p37
      %p387 = pneg %p34
      %p388 = scmp.lt.s32.totalorder %s21, 3
      %s389 = scalar_select %p388, %s21, 3
      %s390 = smul.addr %s389, 4
      %s391 = scalar_lea.vmem %s1, %s390
      %p392 = pneg %p63
      %p393 = pneg %p60
      %p394 = scmp.lt.s32.totalorder %s21, 3
      %s395 = scalar_select %p394, %s21, 3
      %s396 = smul.addr %s395, 8
      %s397 = scalar_lea.vmem %s2, %s396
      %p398 = pneg %p89
      %p399 = pneg %p86
      %p400 = scmp.lt.s32.totalorder %s21, 3
      %s401 = scalar_select %p400, %s21, 3
      %s402 = smul.addr %s401, 4
      %s403 = scalar_lea.vmem %s3, %s402
      %p404 = pneg %p115
      %p405 = pneg %p112
      %p406 = scmp.lt.s32.totalorder %s21, 3
      %s407 = scalar_select %p406, %s21, 3
      %s408 = smul.addr %s407, 8
      %s409 = scalar_lea.vmem %s4, %s408
      %p410 = pneg %p141
      %p411 = pneg %p138
      %p412 = scmp.lt.s32.totalorder %s21, 3
      %s413 = scalar_select %p412, %s21, 3
      %s414 = smul.addr %s413, 3
      %s415 = smul.addr %s414, 4
      %s416 = scalar_lea.vmem %s5, %s415
      %p417 = pneg %p167
      %p418 = pneg %p164
      %p419 = scmp.lt.s32.totalorder %s21, 3
      %s420 = scalar_select %p419, %s21, 3
      %s421 = smul.addr %s420, 8
      %s422 = scalar_lea.vmem %s6, %s421
      %p423 = pneg %p193
      %p424 = pneg %p190
      %p425 = scmp.lt.s32.totalorder %s21, 3
      %s426 = scalar_select %p425, %s21, 3
      %s427 = smul.addr %s426, 4
      %s428 = scalar_lea.vmem %s7, %s427
      %p429 = pneg %p219
      %p430 = pneg %p216
      %p431 = scmp.lt.s32.totalorder %s21, 3
      %s432 = scalar_select %p431, %s21, 3
      %s433 = smul.addr %s432, 8
      %s434 = scalar_lea.vmem %s8, %s433
      %p435 = pneg %p245
      %p436 = pneg %p242
      %p437 = scmp.lt.s32.totalorder %s21, 3
      %s438 = scalar_select %p437, %s21, 3
      %s439 = smul.addr %s438, 2
      %s440 = smul.addr %s439, 8
      %s441 = scalar_lea.vmem %s9, %s440
      %p442 = pneg %p271
      %p443 = pneg %p268
      %p444 = pneg %p292
      %p445 = pneg %p289
      %p446 = scmp.lt.s32.totalorder %s21, 3
      %s447 = scalar_select %p446, %s21, 3
      %s448 = smul.addr %s447, 4
      %s449 = scalar_lea.vmem %s1, %s448
      %p450 = scmp.lt.s32.totalorder %s21, 3
      %s451 = scalar_select %p450, %s21, 3
      %s452 = smul.addr %s451, 8
      %s453 = scalar_lea.vmem %s2, %s452
      %p454 = scmp.lt.s32.totalorder %s21, 3
      %s455 = scalar_select %p454, %s21, 3
      %s456 = smul.addr %s455, 4
      %s457 = scalar_lea.vmem %s3, %s456
      %p458 = scmp.lt.s32.totalorder %s21, 3
      %s459 = scalar_select %p458, %s21, 3
      %s460 = smul.addr %s459, 8
      %s461 = scalar_lea.vmem %s4, %s460
      %p462 = scmp.lt.s32.totalorder %s21, 3
      %s463 = scalar_select %p462, %s21, 3
      %s464 = smul.addr %s463, 3
      %s465 = smul.addr %s464, 4
      %s466 = scalar_lea.vmem %s5, %s465
      %p467 = scmp.lt.s32.totalorder %s21, 3
      %s468 = scalar_select %p467, %s21, 3
      %s469 = smul.addr %s468, 8
      %s470 = scalar_lea.vmem %s6, %s469
      %p471 = scmp.lt.s32.totalorder %s21, 3
      %s472 = scalar_select %p471, %s21, 3
      %s473 = smul.addr %s472, 4
      %s474 = scalar_lea.vmem %s7, %s473
      %p475 = scmp.lt.s32.totalorder %s21, 3
      %s476 = scalar_select %p475, %s21, 3
      %s477 = smul.addr %s476, 8
      %s478 = scalar_lea.vmem %s8, %s477
      %p479 = scmp.lt.s32.totalorder %s21, 3
      %s480 = scalar_select %p479, %s21, 3
      %s481 = smul.addr %s480, 2
      %s482 = smul.addr %s481, 8
      %s483 = scalar_lea.vmem %s9, %s482
      %p485 = scmp.eq.s32.totalorder %s21, 0
      // Predicated region
      $region61: #{res_projection_forward.1} parent=59 // pred_check
        %p486 = pneg %p485
      $region62: #{res_projection_forward.1} parent=59 // pred_check_branch
        %488 = sbr.rel (%p486) target = $region64
      $region63: #{res_projection_forward.1} parent=59 // pred_region
        %v489 = vld [vmem:[%s0] sm:$0xff]
        %490 = vst [vmem:[%s10] sm:$0xff] %v489
      $region64: #{res_projection_forward.1} parent=59 // pred_fallthru
        _
      %v491 = vld [vmem:[%s10] sm:$0xff]
      %v492 = vpack.c.bf16 %v491, %v491
      %v493 = vld [vmem:[%s449] sm:$0xf]
      %v494 = vld [vmem:[%s453] sm:$0xff]
      %496 = vset.pattern.permute.xlu0 0
      %497 = vperm.xlu0 %496, %v494
      %v498 = vpop.permute.xlu0 %497
      %vm500 = vcmask 64512
      %v502 = vsel %vm500, %v493, 0
      %vm504 = vcmask 1043456
      %v506 = vsel %vm504, %v492, 0
      %508 = vmatprep.subr.bf16.mxu0 0
      %509 = vmatpush1.bf16.msra.mxu0 %v506
      %510 = vmatprep.subr.bf16.mxu0 0
      %511 = vmatpush1.bf16.msra.mxu0 0
      %512 = vmatprep.subr.bf16.mxu0 0
      %513 = vmatpush1.bf16.msra.mxu0 0
      %514 = vmatprep.subr.bf16.mxu0 0
      %515 = vmatpush1.bf16.msra.mxu0 0
      %516 = vmatprep.subr.bf16.mxu0 0
      %517 = vmatpush1.bf16.msra.mxu0 0
      %518 = vmatprep.subr.bf16.mxu0 0
      %519 = vmatpush1.bf16.msra.mxu0 0
      %520 = vmatprep.subr.bf16.mxu0 0
      %521 = vmatpush1.bf16.msra.mxu0 0
      %522 = vmatprep.subr.bf16.mxu0 0
      %523 = vmatpush1.bf16.msra.mxu0 0
      %524 = vmatprep.subr.bf16.mxu0 0
      %525 = vmatpush1.bf16.msra.mxu0 0
      %526 = vmatprep.subr.bf16.mxu0 0
      %527 = vmatpush1.bf16.msra.mxu0 0
      %528 = vmatprep.subr.bf16.mxu0 0
      %529 = vmatpush1.bf16.msra.mxu0 0
      %530 = vmatprep.subr.bf16.mxu0 0
      %531 = vmatpush1.bf16.msra.mxu0 0
      %532 = vmatprep.subr.bf16.mxu0 0
      %533 = vmatpush1.bf16.msra.mxu0 0
      %534 = vmatprep.subr.bf16.mxu0 0
      %535 = vmatpush1.bf16.msra.mxu0 0
      %536 = vmatprep.subr.bf16.mxu0 0
      %537 = vmatpush1.bf16.msra.mxu0 0
      %538 = vmatprep.subr.bf16.mxu0 0
      %539 = vmatpush1.bf16.msra.mxu0 0
      %540 = vmatprep.mubr.bf16.mxu0 0
      %541 = vmatmul.mubr.bf16.gmra.mrb[0].mxu0 %v502
      %v542 = vpop.f32.mrb[0].mxu0
      %v543 = vadd.f32 %v498, %v542
      %v544 = vpop.f32.mrb[0].mxu0
      %v545 = vpop.f32.mrb[0].mxu0
      %v546 = vpop.f32.mrb[0].mxu0
      %547 = vdwg.mxu0
      %v548 = vtanh.pop %v543
      %v549 = vld [vmem:[%s457] sm:$0xf]
      %v550 = vld [vmem:[%s461] sm:$0xff]
      %552 = vset.pattern.permute.xlu0 0
      %553 = vperm.xlu0 %552, %v550
      %v554 = vpop.permute.xlu0 %553
      %v557 = vsel %vm500, %v549, 0
      %559 = vmatprep.subr.bf16.mxu0 0
      %560 = vmatpush1.bf16.msra.mxu0 %v506
      %561 = vmatprep.subr.bf16.mxu0 0
      %562 = vmatpush1.bf16.msra.mxu0 0
      %563 = vmatprep.subr.bf16.mxu0 0
      %564 = vmatpush1.bf16.msra.mxu0 0
      %565 = vmatprep.subr.bf16.mxu0 0
      %566 = vmatpush1.bf16.msra.mxu0 0
      %567 = vmatprep.subr.bf16.mxu0 0
      %568 = vmatpush1.bf16.msra.mxu0 0
      %569 = vmatprep.subr.bf16.mxu0 0
      %570 = vmatpush1.bf16.msra.mxu0 0
      %571 = vmatprep.subr.bf16.mxu0 0
      %572 = vmatpush1.bf16.msra.mxu0 0
      %573 = vmatprep.subr.bf16.mxu0 0
      %574 = vmatpush1.bf16.msra.mxu0 0
      %575 = vmatprep.subr.bf16.mxu0 0
      %576 = vmatpush1.bf16.msra.mxu0 0
      %577 = vmatprep.subr.bf16.mxu0 0
      %578 = vmatpush1.bf16.msra.mxu0 0
      %579 = vmatprep.subr.bf16.mxu0 0
      %580 = vmatpush1.bf16.msra.mxu0 0
      %581 = vmatprep.subr.bf16.mxu0 0
      %582 = vmatpush1.bf16.msra.mxu0 0
      %583 = vmatprep.subr.bf16.mxu0 0
      %584 = vmatpush1.bf16.msra.mxu0 0
      %585 = vmatprep.subr.bf16.mxu0 0
      %586 = vmatpush1.bf16.msra.mxu0 0
      %587 = vmatprep.subr.bf16.mxu0 0
      %588 = vmatpush1.bf16.msra.mxu0 0
      %589 = vmatprep.subr.bf16.mxu0 0
      %590 = vmatpush1.bf16.msra.mxu0 0
      %591 = vmatprep.mubr.bf16.mxu0 0
      %592 = vmatmul.mubr.bf16.gmra.mrb[0].mxu0 %v557
      %v593 = vpop.f32.mrb[0].mxu0
      %v594 = vadd.f32 %v554, %v593
      %v595 = vpop.f32.mrb[0].mxu0
      %v596 = vpop.f32.mrb[0].mxu0
      %v597 = vpop.f32.mrb[0].mxu0
      %598 = vdwg.mxu0
      %v599 = vxor.u32 %v594, 2147483648
      %v600 = vmul.f32 %v599, 1.442695
      %v601 = vpow.pop %v600
      %v602 = vadd.f32 %v601, 1.0
      %v603 = vrcp.pop %v602
      %v604 = vmul.f32 1.0, %v603
      %v605 = vsub.f32 %v548, %v491
      %v606 = vmul.f32 %v604, %v605
      %v607 = vadd.f32 %v491, %v606
      %v608 = vpack.c.bf16 %v607, %v607
      %v609 = vld [vmem:[%s466] sm:$0xf]
      %v610 = vld [vmem:[%s466 + $0x4] sm:$0xf]
      %v611 = vld [vmem:[%s466 + $0x8] sm:$0xf]
      %v615 = vunpack.c.l.b16 %v609
      %v616 = vunpack.c.l.b16 %v610
      %v617 = vunpack.c.l.b16 %v611
      %v618 = vpack.c.b16 %v616, %v615
      %v619 = vpack.c.b16 %v617, %v617
      %v621 = vsel %vm500, %v618, 0
      %v624 = vsel %vm500, %v619, 0
      %v627 = vsel %vm504, %v608, 0
      %629 = vmatprep.subr.bf16.mxu0 0
      %630 = vmatpush1.bf16.msra.mxu0 %v627
      %631 = vmatprep.subr.bf16.mxu0 0
      %632 = vmatpush1.bf16.msra.mxu0 0
      %633 = vmatprep.subr.bf16.mxu0 0
      %634 = vmatpush1.bf16.msra.mxu0 0
      %635 = vmatprep.subr.bf16.mxu0 0
      %636 = vmatpush1.bf16.msra.mxu0 0
      %637 = vmatprep.subr.bf16.mxu0 0
      %638 = vmatpush1.bf16.msra.mxu0 0
      %639 = vmatprep.subr.bf16.mxu0 0
      %640 = vmatpush1.bf16.msra.mxu0 0
      %641 = vmatprep.subr.bf16.mxu0 0
      %642 = vmatpush1.bf16.msra.mxu0 0
      %643 = vmatprep.subr.bf16.mxu0 0
      %644 = vmatpush1.bf16.msra.mxu0 0
      %645 = vmatprep.subr.bf16.mxu0 0
      %646 = vmatpush1.bf16.msra.mxu0 0
      %647 = vmatprep.subr.bf16.mxu0 0
      %648 = vmatpush1.bf16.msra.mxu0 0
      %649 = vmatprep.subr.bf16.mxu0 0
      %650 = vmatpush1.bf16.msra.mxu0 0
      %651 = vmatprep.subr.bf16.mxu0 0
      %652 = vmatpush1.bf16.msra.mxu0 0
      %653 = vmatprep.subr.bf16.mxu0 0
      %654 = vmatpush1.bf16.msra.mxu0 0
      %655 = vmatprep.subr.bf16.mxu0 0
      %656 = vmatpush1.bf16.msra.mxu0 0
      %657 = vmatprep.subr.bf16.mxu0 0
      %658 = vmatpush1.bf16.msra.mxu0 0
      %659 = vmatprep.subr.bf16.mxu0 0
      %660 = vmatpush1.bf16.msra.mxu0 0
      %661 = vmatprep.mubr.bf16.mxu0 0
      %662 = vmatmul.mubr.bf16.gmra.mrb[0].mxu0 %v621
      %v663 = vpop.f32.mrb[0].mxu0
      %v664 = vadd.f32 0.0, %v663
      %v665 = vpop.f32.mrb[0].mxu0
      %v666 = vpop.f32.mrb[0].mxu0
      %v667 = vadd.f32 0.0, %v666
      %v668 = vpop.f32.mrb[0].mxu0
      %669 = vmatprep.mubr.bf16.mxu0 0
      %670 = vmatmul.mubr.bf16.gmra.mrb[0].mxu0 %v624
      %v671 = vpop.f32.mrb[0].mxu0
      %v672 = vadd.f32 0.0, %v671
      %v673 = vpop.f32.mrb[0].mxu0
      %v674 = vpop.f32.mrb[0].mxu0
      %v675 = vpop.f32.mrb[0].mxu0
      %676 = vdwg.mxu0
      %v677 = vld [vmem:[%s483] sm:$0xff]
      %v678 = vld [vmem:[%s483 + $0x8] sm:$0xf]
      %v679 = vlaneseq
      %v680 = vshrl.u32 %v679, 7
      %v681 = vsub.s32 0, %v680
      %v682 = vrot.slane %v677, %v681
      %v683 = vmul.f32 %v682, %v664
      %v684 = vlaneseq
      %v685 = vshrl.u32 %v684, 7
      %v686 = vsub.s32 4, %v685
      %v687 = vrot.slane %v677, %v686
      %v688 = vmul.f32 %v687, %v667
      %v689 = vadd.f32 %v683, %v688
      %v690 = vlaneseq
      %v691 = vshrl.u32 %v690, 7
      %v692 = vsub.s32 0, %v691
      %v693 = vrot.slane %v678, %v692
      %v694 = vmul.f32 %v693, %v672
      %v695 = vadd.f32 %v689, %v694
      %699 = vrot.lane.b32.xlu0 %v664, 96
      %v700 = vpop.permute.xlu0 %699
      %701 = vrot.lane.b32.xlu0 %v667, 96
      %v702 = vpop.permute.xlu0 %701
      %703 = vrot.lane.b32.xlu0 %v672, 96
      %v704 = vpop.permute.xlu0 %703
      %v708 = vlaneseq
      %v709 = vshrl.u32 %v708, 7
      %v710 = vsub.s32 1, %v709
      %v711 = vrot.slane %v677, %v710
      %v712 = vmul.f32 %v711, %v700
      %v713 = vadd.f32 %v695, %v712
      %v714 = vlaneseq
      %v715 = vshrl.u32 %v714, 7
      %v716 = vsub.s32 5, %v715
      %v717 = vrot.slane %v677, %v716
      %v718 = vmul.f32 %v717, %v702
      %v719 = vadd.f32 %v713, %v718
      %v720 = vlaneseq
      %v721 = vshrl.u32 %v720, 7
      %v722 = vsub.s32 1, %v721
      %v723 = vrot.slane %v678, %v722
      %v724 = vmul.f32 %v723, %v704
      %v725 = vadd.f32 %v719, %v724
      %726 = vrot.lane.b32.xlu0 %v664, 64
      %v727 = vpop.permute.xlu0 %726
      %728 = vrot.lane.b32.xlu0 %v667, 64
      %v729 = vpop.permute.xlu0 %728
      %730 = vrot.lane.b32.xlu0 %v672, 64
      %v731 = vpop.permute.xlu0 %730
      %v735 = vlaneseq
      %v736 = vshrl.u32 %v735, 7
      %v737 = vsub.s32 2, %v736
      %v738 = vrot.slane %v677, %v737
      %v739 = vmul.f32 %v738, %v727
      %v740 = vadd.f32 %v725, %v739
      %v741 = vlaneseq
      %v742 = vshrl.u32 %v741, 7
      %v743 = vsub.s32 6, %v742
      %v744 = vrot.slane %v677, %v743
      %v745 = vmul.f32 %v744, %v729
      %v746 = vadd.f32 %v740, %v745
      %v747 = vlaneseq
      %v748 = vshrl.u32 %v747, 7
      %v749 = vsub.s32 2, %v748
      %v750 = vrot.slane %v678, %v749
      %v751 = vmul.f32 %v750, %v731
      %v752 = vadd.f32 %v746, %v751
      %753 = vrot.lane.b32.xlu0 %v664, 32
      %v754 = vpop.permute.xlu0 %753
      %755 = vrot.lane.b32.xlu0 %v667, 32
      %v756 = vpop.permute.xlu0 %755
      %757 = vrot.lane.b32.xlu0 %v672, 32
      %v758 = vpop.permute.xlu0 %757
      %v762 = vlaneseq
      %v763 = vshrl.u32 %v762, 7
      %v764 = vsub.s32 3, %v763
      %v765 = vrot.slane %v677, %v764
      %v766 = vmul.f32 %v765, %v754
      %v767 = vadd.f32 %v752, %v766
      %v768 = vlaneseq
      %v769 = vshrl.u32 %v768, 7
      %v770 = vsub.s32 7, %v769
      %v771 = vrot.slane %v677, %v770
      %v772 = vmul.f32 %v771, %v756
      %v773 = vadd.f32 %v767, %v772
      %v774 = vlaneseq
      %v775 = vshrl.u32 %v774, 7
      %v776 = vsub.s32 3, %v775
      %v777 = vrot.slane %v678, %v776
      %v778 = vmul.f32 %v777, %v758
      %v779 = vadd.f32 %v773, %v778
      %v780 = vld [vmem:[%s470] sm:$0xff]
      %782 = vset.pattern.permute.xlu0 0
      %783 = vperm.xlu0 %782, %v780
      %v784 = vpop.permute.xlu0 %783
      %v786 = vadd.f32 %v779, %v784
      %v787 = vtanh.pop %v786
      %v788 = vld [vmem:[%s474] sm:$0xf]
      %v789 = vld [vmem:[%s478] sm:$0xff]
      %791 = vset.pattern.permute.xlu0 0
      %792 = vperm.xlu0 %791, %v789
      %v793 = vpop.permute.xlu0 %792
      %v796 = vsel %vm500, %v788, 0
      %798 = vmatprep.subr.bf16.mxu0 0
      %799 = vmatpush1.bf16.msra.mxu0 %v627
      %800 = vmatprep.subr.bf16.mxu0 0
      %801 = vmatpush1.bf16.msra.mxu0 0
      %802 = vmatprep.subr.bf16.mxu0 0
      %803 = vmatpush1.bf16.msra.mxu0 0
      %804 = vmatprep.subr.bf16.mxu0 0
      %805 = vmatpush1.bf16.msra.mxu0 0
      %806 = vmatprep.subr.bf16.mxu0 0
      %807 = vmatpush1.bf16.msra.mxu0 0
      %808 = vmatprep.subr.bf16.mxu0 0
      %809 = vmatpush1.bf16.msra.mxu0 0
      %810 = vmatprep.subr.bf16.mxu0 0
      %811 = vmatpush1.bf16.msra.mxu0 0
      %812 = vmatprep.subr.bf16.mxu0 0
      %813 = vmatpush1.bf16.msra.mxu0 0
      %814 = vmatprep.subr.bf16.mxu0 0
      %815 = vmatpush1.bf16.msra.mxu0 0
      %816 = vmatprep.subr.bf16.mxu0 0
      %817 = vmatpush1.bf16.msra.mxu0 0
      %818 = vmatprep.subr.bf16.mxu0 0
      %819 = vmatpush1.bf16.msra.mxu0 0
      %820 = vmatprep.subr.bf16.mxu0 0
      %821 = vmatpush1.bf16.msra.mxu0 0
      %822 = vmatprep.subr.bf16.mxu0 0
      %823 = vmatpush1.bf16.msra.mxu0 0
      %824 = vmatprep.subr.bf16.mxu0 0
      %825 = vmatpush1.bf16.msra.mxu0 0
      %826 = vmatprep.subr.bf16.mxu0 0
      %827 = vmatpush1.bf16.msra.mxu0 0
      %828 = vmatprep.subr.bf16.mxu0 0
      %829 = vmatpush1.bf16.msra.mxu0 0
      %830 = vmatprep.mubr.bf16.mxu0 0
      %831 = vmatmul.mubr.bf16.gmra.mrb[0].mxu0 %v796
      %v832 = vpop.f32.mrb[0].mxu0
      %v833 = vadd.f32 %v793, %v832
      %v834 = vpop.f32.mrb[0].mxu0
      %v835 = vpop.f32.mrb[0].mxu0
      %v836 = vpop.f32.mrb[0].mxu0
      %837 = vdwg.mxu0
      %v838 = vxor.u32 %v833, 2147483648
      %v839 = vmul.f32 %v838, 1.442695
      %v840 = vpow.pop %v839
      %v841 = vadd.f32 %v840, 1.0
      %v842 = vrcp.pop %v841
      %v843 = vmul.f32 1.0, %v842
      %v844 = vsub.f32 %v787, %v607
      %v845 = vmul.f32 %v843, %v844
      %v846 = vadd.f32 %v607, %v845
      %v847 = vtanh.pop %v846
      %v848 = vadd.f32 %v491, %v847
      %849 = vst [vmem:[%s10] sm:$0xff] %v848
      // Predicated region
      $region65: #{res_projection_forward.1} parent=59 // pred_check
        %p850 = pneg %p289
      $region66: #{res_projection_forward.1} parent=59 // pred_check_branch
        %852 = sbr.rel (%p850) target = $region68
      $region67: #{res_projection_forward.1} parent=59 // pred_region
        _
      $region68: #{res_projection_forward.1} parent=59 // pred_fallthru
        _
      // Predicated region
      $region69: #{res_projection_forward.1} parent=59 // pred_check
        %p853 = pneg %p289
      $region70: #{res_projection_forward.1} parent=59 // pred_check_branch
        %855 = sbr.rel (%p853) target = $region72
      $region71: #{res_projection_forward.1} parent=59 // pred_region
        _
      $region72: #{res_projection_forward.1} parent=59 // pred_fallthru
        _
    $region60: #{res_projection_forward.1} parent=5 // pred_fallthru
      _
    %p856 = scmp.le.s32.totalorder 2, %s16
    // Predicated region
    $region73: #{res_projection_forward.1} parent=5 // pred_check
      %p857 = pneg %p856
    $region74: #{res_projection_forward.1} parent=5 // pred_check_branch
      %859 = sbr.rel (%p857) target = $region76
    $region75: #{res_projection_forward.1} parent=5 // pred_region
      %s860 = ssub.s32 %s16, 2
    $region76: #{res_projection_forward.1} parent=5 // pred_fallthru
      _
  $region6: #{res_projection_forward.1} parent=0 // loop_footer
    %s20 = sadd.s32 1, %s16
  $region7: #{res_projection_forward.1} parent=0 // loop_footer_branch
    %15 = sbr.rel target = $region3
  $region8: #{res_projection_forward.1} parent=0 // loop_exit
    _

</llo_original>
